<compile_context>
chip_gen: v5e
topology: v5e:2x2
jax: 0.10.0
libtpu: 0.0.40
codegen_flags: <defaults>
</compile_context>

<pallas_src>
import math
import functools

import jax
import jax.numpy as jnp
from jax.experimental import pallas as pl
from jax.experimental.pallas import tpu as pltpu


def _gelu(x, approximate):
    if approximate:
        # tanh-approx GELU: lowers to the EUP slot instead of a long VPU erf polynomial.
        c = math.sqrt(2.0 / math.pi)
        return 0.5 * x * (1.0 + jnp.tanh(c * (x + 0.044715 * (x * x * x))))
    # PyTorch nn.GELU() default is the exact erf-based GELU.
    return 0.5 * x * (1.0 + jax.lax.erf(x * (1.0 / math.sqrt(2.0))))


def _cond_mlp_kernel(approx_gelu,
                     xt_ref, freqs_ref, ws_ref, wc_ref, bias_ref,
                     wb_ref, bb_ref, wout_ref, bout_ref, o_ref):
    f32 = jnp.float32

    # Single fused sinusoidal-embedding argument: (tb, 3*half) * (1, 3*half).
    e = xt_ref[...] * freqs_ref[...]

    # First Linear as two K=3*half matmuls (sin block + cos block) + per-row/const bias.
    h = (jnp.dot(jnp.sin(e), ws_ref[...], preferred_element_type=f32)
         + jnp.dot(jnp.cos(e), wc_ref[...], preferred_element_type=f32)
         + bias_ref[...])
    h = _gelu(h, approx_gelu)

    # hidden_layers residual Blocks: x + GELU(Linear(x))   (static unroll; L is small)
    for i in range(wb_ref.shape[0]):
        ff = jnp.dot(h, wb_ref[i], preferred_element_type=f32) + bb_ref[i]
        h = h + _gelu(ff, approx_gelu)

    out = jnp.dot(h, wout_ref[...], preferred_element_type=f32) + bout_ref[...]
    o_ref[...] = out.astype(o_ref.dtype)


def _round_up(n, m):
    return (n + m - 1) // m * m


def conditional_mlp_forward(params, x, t, class_labels=None, *,
                            tile_b=2048, approx_gelu=False, core_parallel=False):
    """x: (B, 2) f32, t: (B,) f32, class_labels: (B,) int32 or None -> (B, 2) f32."""
    B = x.shape[0]
    half = params["freqs"].shape[-1]
    emb = 2 * half
    hidden = params["b0"].shape[-1]

    # --- host-side operand prep (cheap, one-time per call) -------------------------
    freqs = params["freqs"].reshape(half)
    freqs3 = jnp.concatenate([25.0 * freqs, 25.0 * freqs, freqs]).reshape(1, 3 * half)

    x32 = x.astype(jnp.float32)
    t32 = t.reshape(B, 1).astype(jnp.float32)
    xt3 = jnp.concatenate([
        jnp.broadcast_to(x32[:, 0:1], (B, half)),
        jnp.broadcast_to(x32[:, 1:2], (B, half)),
        jnp.broadcast_to(t32, (B, half)),
    ], axis=-1)                                                   # (B, 3*half)

    # Reorder the first Linear's rows into a sin-block and a cos-block weight.
    w0 = params["w0"]
    ws = jnp.concatenate([w0[0:half], w0[emb:emb + half],
                          w0[2 * emb:2 * emb + half]], axis=0)    # (3*half, H)
    wc = jnp.concatenate([w0[half:emb], w0[emb + half:2 * emb],
                          w0[2 * emb + half:3 * emb]], axis=0)    # (3*half, H)
    wcls = w0[3 * emb:4 * emb]                                    # (emb, H)

    has_class = class_labels is not None
    if has_class:
        # Fold class embedding through the first Linear + its bias into a per-class
        # table; the data-dependent gather (embedding lookup) stays in JAX.
        class_table = params["class_emb"].astype(jnp.float32) @ wcls + params["b0"]
        bias = jnp.take(class_table, class_labels, axis=0)        # (B, H)
    else:
        bias = params["b0"]                                       # (1, H); class emb == 0

    # --- batch tiling ---------------------------------------------------------------
    tb = min(tile_b, _round_up(B, 8))
    if core_parallel:
        # v7x: keep >= 2 grid steps so the batch axis genuinely spans both TensorCores.
        tb = min(tb, max(8, _round_up(pl.cdiv(B, 2), 8)))
    Bp = _round_up(B, tb)
    if Bp != B:
        xt3 = jnp.pad(xt3, ((0, Bp - B), (0, 0)))
        if has_class:
            bias = jnp.pad(bias, ((0, Bp - B), (0, 0)))
    grid = (Bp // tb,)

    def row_spec(feat):            # batch-tiled activations / outputs
        return pl.BlockSpec((tb, feat), lambda i: (i, 0))

    def const_spec(shape):         # weights: constant block index -> VMEM-resident
        nd = len(shape)
        return pl.BlockSpec(shape, lambda i, _nd=nd: (0,) * _nd)

    operands = [xt3, freqs3, ws, wc, bias,
                params["wb"], params["bb"], params["wout"], params["bout"]]
    in_specs = [row_spec(3 * half),
                const_spec(freqs3.shape),
                const_spec(ws.shape),
                const_spec(wc.shape),
                row_spec(hidden) if has_class else const_spec(bias.shape),
                const_spec(params["wb"].shape),
                const_spec(params["bb"].shape),
                const_spec(params["wout"].shape),
                const_spec(params["bout"].shape)]

    dim_sems = (pltpu.CORE_PARALLEL,) if core_parallel else ("parallel",)

    kernel = functools.partial(_cond_mlp_kernel, approx_gelu)

    out = pl.pallas_call(
        kernel,
        out_shape=jax.ShapeDtypeStruct((Bp, 2), jnp.float32),
        grid=grid,
        in_specs=in_specs,
        out_specs=row_spec(2),
        compiler_params=pltpu.CompilerParams(dimension_semantics=dim_sems),
    )(*operands)
    return out[:B]


def init_params(key, emb_size=32, hidden_size=32, hidden_layers=3, num_classes=1):
    half = emb_size // 2
    # SinusoidalEmbedding frequencies: exp(-log(1e4)/(half-1) * arange(half))
    coef = math.log(10000.0) / (half - 1)
    freqs = jnp.exp(-coef * jnp.arange(half, dtype=jnp.float32)).reshape(1, half)

    concat_size = 4 * emb_size  # 3 sinusoidal embeddings + class embedding
    ks = jax.random.split(key, hidden_layers + 3)

    def lin(k, fan_in, fan_out):
        kw, kb = jax.random.split(k)
        bound = 1.0 / math.sqrt(fan_in)
        w = jax.random.uniform(kw, (fan_in, fan_out), jnp.float32, -bound, bound)
        b = jax.random.uniform(kb, (1, fan_out), jnp.float32, -bound, bound)
        return w, b

    w0, b0 = lin(ks[0], concat_size, hidden_size)
    wbs, bbs = [], []
    for i in range(hidden_layers):
        w, b = lin(ks[1 + i], hidden_size, hidden_size)
        wbs.append(w)
        bbs.append(b)
    wout, bout = lin(ks[hidden_layers + 1], hidden_size, 2)
    class_emb = jax.random.normal(ks[hidden_layers + 2], (num_classes, emb_size), jnp.float32)

    return {
        "freqs": freqs,
        "class_emb": class_emb,
        "w0": w0, "b0": b0,
        "wb": jnp.stack(wbs), "bb": jnp.stack(bbs),
        "wout": wout, "bout": bout,
    }


def reference_forward(params, x, t, class_labels=None):
    """Pure-JAX reference mirroring the PyTorch module, for a sanity check."""
    B = x.shape[0]
    freqs = params["freqs"]
    emb_size = freqs.shape[-1] * 2

    def sincos(v, scale):
        e = (v * scale).reshape(B, 1) * freqs
        return jnp.concatenate([jnp.sin(e), jnp.cos(e)], axis=-1)

    x1 = sincos(x[:, 0], 25.0)
    x2 = sincos(x[:, 1], 25.0)
    te = sincos(t, 1.0)
    ce = (jnp.zeros((B, emb_size), jnp.float32) if class_labels is None
          else jnp.take(params["class_emb"], class_labels, axis=0))
    h = jnp.concatenate([x1, x2, te, ce], axis=-1)
    h = _gelu(h @ params["w0"] + params["b0"], False)
    for i in range(params["wb"].shape[0]):
        h = h + _gelu(h @ params["wb"][i] + params["bb"][i], False)
    return h @ params["wout"] + params["bout"]


if __name__ == "__main__":
    key = jax.random.PRNGKey(0)
    k_p, k_x1, k_t1, k_l1, k_x2, k_t2 = jax.random.split(key, 6)

    # Small demo sizes consistent with the module (scaled-down emb/hidden).
    params = init_params(k_p, emb_size=32, hidden_size=32, hidden_layers=3, num_classes=4)

    # Case 1: small batch, class-conditional path (single grid step, per-class bias fold).
    B1 = 8
    x1 = jax.random.normal(k_x1, (B1, 2), jnp.float32)                    # 2-D points
    t1 = jax.random.uniform(k_t1, (B1,), jnp.float32, 0.0, 1000.0)        # timesteps
    labels = jax.random.randint(k_l1, (B1,), 0, 4)                        # class ids
    out1 = jax.block_until_ready(conditional_mlp_forward(params, x1, t1, labels))
    ref1 = reference_forward(params, x1, t1, labels)
    assert out1.shape == (B1, 2)
    assert jnp.allclose(out1, ref1, rtol=1e-3, atol=1e-3), "mismatch (conditional)"

    # Case 2: non-multiple-of-tile batch, unconditional path
    # (exercises multi-step grid, batch padding, and the const-bias kernel variant).
    B2 = 300
    x2 = jax.random.normal(k_x2, (B2, 2), jnp.float32)
    t2 = jax.random.uniform(k_t2, (B2,), jnp.float32, 0.0, 1000.0)
    out2 = jax.block_until_ready(
        conditional_mlp_forward(params, x2, t2, None, tile_b=128))
    ref2 = reference_forward(params, x2, t2, None)
    assert out2.shape == (B2, 2)
    assert jnp.allclose(out2, ref2, rtol=1e-3, atol=1e-3), "mismatch (unconditional)"

    # Case 3: fast tanh-GELU path (EUP slot). Numerics differ slightly from exact erf,
    # so only sanity-check it here; enable in production if the tolerance budget allows.
    out3 = jax.block_until_ready(
        conditional_mlp_forward(params, x2, t2, None, tile_b=128, approx_gelu=True))
    assert out3.shape == (B2, 2) and bool(jnp.all(jnp.isfinite(out3)))

    print("KERNEL_OK")
</pallas_src>

<mosaic_0001>
module attributes {stable_mosaic.version = 11 : i64} {
  func.func @_cond_mlp_kernel(%arg0: i32, %arg1: memref<8x48xf32, #tpu.memory_space<vmem>>, %arg2: memref<1x48xf32, #tpu.memory_space<vmem>>, %arg3: memref<48x32xf32, #tpu.memory_space<vmem>>, %arg4: memref<48x32xf32, #tpu.memory_space<vmem>>, %arg5: memref<8x32xf32, #tpu.memory_space<vmem>>, %arg6: memref<3x32x32xf32, #tpu.memory_space<vmem>>, %arg7: memref<3x1x32xf32, #tpu.memory_space<vmem>>, %arg8: memref<32x2xf32, #tpu.memory_space<vmem>>, %arg9: memref<1x2xf32, #tpu.memory_space<vmem>>, %arg10: memref<8x2xf32, #tpu.memory_space<vmem>>) attributes {dimension_semantics = [#tpu.dimension_semantics<parallel>], iteration_bounds = array<i64: 1>, scalar_prefetch = 0 : i64, scratch_operands = 0 : i64, tpu.core_type = #tpu.core_type<tc>, window_params = [{transform_indices = @transform_0, window_bounds = array<i64: 8, 48>}, {pipeline_mode = #tpu.pipeline_mode<synchronous>, transform_indices = @transform_1, window_bounds = array<i64: 1, 48>}, {pipeline_mode = #tpu.pipeline_mode<synchronous>, transform_indices = @transform_2, window_bounds = array<i64: 48, 32>}, {pipeline_mode = #tpu.pipeline_mode<synchronous>, transform_indices = @transform_3, window_bounds = array<i64: 48, 32>}, {transform_indices = @transform_4, window_bounds = array<i64: 8, 32>}, {pipeline_mode = #tpu.pipeline_mode<synchronous>, transform_indices = @transform_5, window_bounds = array<i64: 3, 32, 32>}, {pipeline_mode = #tpu.pipeline_mode<synchronous>, transform_indices = @transform_6, window_bounds = array<i64: 3, 1, 32>}, {pipeline_mode = #tpu.pipeline_mode<synchronous>, transform_indices = @transform_7, window_bounds = array<i64: 32, 2>}, {pipeline_mode = #tpu.pipeline_mode<synchronous>, transform_indices = @transform_8, window_bounds = array<i64: 1, 2>}, {transform_indices = @transform_9, window_bounds = array<i64: 8, 2>}]} {
    %c0 = arith.constant 0 : index
    %c0_0 = arith.constant 0 : index
    %0 = vector.load %arg1[%c0, %c0_0] : memref<8x48xf32, #tpu.memory_space<vmem>>, vector<8x48xf32>
    %c0_1 = arith.constant 0 : index
    %c0_2 = arith.constant 0 : index
    %1 = vector.load %arg2[%c0_1, %c0_2] : memref<1x48xf32, #tpu.memory_space<vmem>>, vector<1x48xf32>
    %2 = vector.broadcast %1 : vector<1x48xf32> to vector<8x48xf32>
    %3 = arith.mulf %0, %2 : vector<8x48xf32>
    %4 = math.sin %3 : vector<8x48xf32>
    %c0_3 = arith.constant 0 : index
    %c0_4 = arith.constant 0 : index
    %5 = vector.load %arg3[%c0_3, %c0_4] : memref<48x32xf32, #tpu.memory_space<vmem>>, vector<48x32xf32>
    %cst = arith.constant dense<0.000000e+00> : vector<8x32xf32>
    %6 = tpu.matmul %4, %5, %cst {dimension_numbers = #tpu.dot_dimension_numbers<[1], [0], [0], [1], [0, 0, 1, 1], [], []>} : vector<8x48xf32>, vector<48x32xf32>, vector<8x32xf32> -> vector<8x32xf32>
    %7 = math.cos %3 : vector<8x48xf32>
    %c0_5 = arith.constant 0 : index
    %c0_6 = arith.constant 0 : index
    %8 = vector.load %arg4[%c0_5, %c0_6] : memref<48x32xf32, #tpu.memory_space<vmem>>, vector<48x32xf32>
    %cst_7 = arith.constant dense<0.000000e+00> : vector<8x32xf32>
    %9 = tpu.matmul %7, %8, %cst_7 {dimension_numbers = #tpu.dot_dimension_numbers<[1], [0], [0], [1], [0, 0, 1, 1], [], []>} : vector<8x48xf32>, vector<48x32xf32>, vector<8x32xf32> -> vector<8x32xf32>
    %10 = arith.addf %6, %9 : vector<8x32xf32>
    %c0_8 = arith.constant 0 : index
    %c0_9 = arith.constant 0 : index
    %11 = vector.load %arg5[%c0_8, %c0_9] : memref<8x32xf32, #tpu.memory_space<vmem>>, vector<8x32xf32>
    %12 = arith.addf %10, %11 : vector<8x32xf32>
    %cst_10 = arith.constant 5.000000e-01 : f32
    %13 = vector.broadcast %cst_10 : f32 to vector<8x32xf32>
    %14 = arith.mulf %13, %12 : vector<8x32xf32>
    %cst_11 = arith.constant 0.707106769 : f32
    %15 = vector.broadcast %cst_11 : f32 to vector<8x32xf32>
    %16 = arith.mulf %12, %15 : vector<8x32xf32>
    %17 = math.erf %16 : vector<8x32xf32>
    %cst_12 = arith.constant 1.000000e+00 : f32
    %18 = vector.broadcast %cst_12 : f32 to vector<8x32xf32>
    %19 = arith.addf %18, %17 : vector<8x32xf32>
    %20 = arith.mulf %14, %19 : vector<8x32xf32>
    %c0_13 = arith.constant 0 : index
    %c0_14 = arith.constant 0 : index
    %c0_15 = arith.constant 0 : index
    %21 = vector.load %arg6[%c0_13, %c0_14, %c0_15] : memref<3x32x32xf32, #tpu.memory_space<vmem>>, vector<1x32x32xf32>
    %22 = vector.shape_cast %21 : vector<1x32x32xf32> to vector<32x32xf32>
    %cst_16 = arith.constant dense<0.000000e+00> : vector<8x32xf32>
    %23 = tpu.matmul %20, %22, %cst_16 {dimension_numbers = #tpu.dot_dimension_numbers<[1], [0], [0], [1], [0, 0, 1, 1], [], []>} : vector<8x32xf32>, vector<32x32xf32>, vector<8x32xf32> -> vector<8x32xf32>
    %c0_17 = arith.constant 0 : index
    %c0_18 = arith.constant 0 : index
    %c0_19 = arith.constant 0 : index
    %24 = vector.load %arg7[%c0_17, %c0_18, %c0_19] : memref<3x1x32xf32, #tpu.memory_space<vmem>>, vector<1x1x32xf32>
    %25 = vector.shape_cast %24 : vector<1x1x32xf32> to vector<1x32xf32>
    %26 = vector.broadcast %25 : vector<1x32xf32> to vector<8x32xf32>
    %27 = arith.addf %23, %26 : vector<8x32xf32>
    %cst_20 = arith.constant 5.000000e-01 : f32
    %28 = vector.broadcast %cst_20 : f32 to vector<8x32xf32>
    %29 = arith.mulf %28, %27 : vector<8x32xf32>
    %cst_21 = arith.constant 0.707106769 : f32
    %30 = vector.broadcast %cst_21 : f32 to vector<8x32xf32>
    %31 = arith.mulf %27, %30 : vector<8x32xf32>
    %32 = math.erf %31 : vector<8x32xf32>
    %cst_22 = arith.constant 1.000000e+00 : f32
    %33 = vector.broadcast %cst_22 : f32 to vector<8x32xf32>
    %34 = arith.addf %33, %32 : vector<8x32xf32>
    %35 = arith.mulf %29, %34 : vector<8x32xf32>
    %36 = arith.addf %20, %35 : vector<8x32xf32>
    %c1 = arith.constant 1 : index
    %c0_23 = arith.constant 0 : index
    %c0_24 = arith.constant 0 : index
    %37 = vector.load %arg6[%c1, %c0_23, %c0_24] : memref<3x32x32xf32, #tpu.memory_space<vmem>>, vector<1x32x32xf32>
    %38 = vector.shape_cast %37 : vector<1x32x32xf32> to vector<32x32xf32>
    %cst_25 = arith.constant dense<0.000000e+00> : vector<8x32xf32>
    %39 = tpu.matmul %36, %38, %cst_25 {dimension_numbers = #tpu.dot_dimension_numbers<[1], [0], [0], [1], [0, 0, 1, 1], [], []>} : vector<8x32xf32>, vector<32x32xf32>, vector<8x32xf32> -> vector<8x32xf32>
    %c1_26 = arith.constant 1 : index
    %c0_27 = arith.constant 0 : index
    %c0_28 = arith.constant 0 : index
    %40 = vector.load %arg7[%c1_26, %c0_27, %c0_28] : memref<3x1x32xf32, #tpu.memory_space<vmem>>, vector<1x1x32xf32>
    %41 = vector.shape_cast %40 : vector<1x1x32xf32> to vector<1x32xf32>
    %42 = vector.broadcast %41 : vector<1x32xf32> to vector<8x32xf32>
    %43 = arith.addf %39, %42 : vector<8x32xf32>
    %cst_29 = arith.constant 5.000000e-01 : f32
    %44 = vector.broadcast %cst_29 : f32 to vector<8x32xf32>
    %45 = arith.mulf %44, %43 : vector<8x32xf32>
    %cst_30 = arith.constant 0.707106769 : f32
    %46 = vector.broadcast %cst_30 : f32 to vector<8x32xf32>
    %47 = arith.mulf %43, %46 : vector<8x32xf32>
    %48 = math.erf %47 : vector<8x32xf32>
    %cst_31 = arith.constant 1.000000e+00 : f32
    %49 = vector.broadcast %cst_31 : f32 to vector<8x32xf32>
    %50 = arith.addf %49, %48 : vector<8x32xf32>
    %51 = arith.mulf %45, %50 : vector<8x32xf32>
    %52 = arith.addf %36, %51 : vector<8x32xf32>
    %c2 = arith.constant 2 : index
    %c0_32 = arith.constant 0 : index
    %c0_33 = arith.constant 0 : index
    %53 = vector.load %arg6[%c2, %c0_32, %c0_33] : memref<3x32x32xf32, #tpu.memory_space<vmem>>, vector<1x32x32xf32>
    %54 = vector.shape_cast %53 : vector<1x32x32xf32> to vector<32x32xf32>
    %cst_34 = arith.constant dense<0.000000e+00> : vector<8x32xf32>
    %55 = tpu.matmul %52, %54, %cst_34 {dimension_numbers = #tpu.dot_dimension_numbers<[1], [0], [0], [1], [0, 0, 1, 1], [], []>} : vector<8x32xf32>, vector<32x32xf32>, vector<8x32xf32> -> vector<8x32xf32>
    %c2_35 = arith.constant 2 : index
    %c0_36 = arith.constant 0 : index
    %c0_37 = arith.constant 0 : index
    %56 = vector.load %arg7[%c2_35, %c0_36, %c0_37] : memref<3x1x32xf32, #tpu.memory_space<vmem>>, vector<1x1x32xf32>
    %57 = vector.shape_cast %56 : vector<1x1x32xf32> to vector<1x32xf32>
    %58 = vector.broadcast %57 : vector<1x32xf32> to vector<8x32xf32>
    %59 = arith.addf %55, %58 : vector<8x32xf32>
    %cst_38 = arith.constant 5.000000e-01 : f32
    %60 = vector.broadcast %cst_38 : f32 to vector<8x32xf32>
    %61 = arith.mulf %60, %59 : vector<8x32xf32>
    %cst_39 = arith.constant 0.707106769 : f32
    %62 = vector.broadcast %cst_39 : f32 to vector<8x32xf32>
    %63 = arith.mulf %59, %62 : vector<8x32xf32>
    %64 = math.erf %63 : vector<8x32xf32>
    %cst_40 = arith.constant 1.000000e+00 : f32
    %65 = vector.broadcast %cst_40 : f32 to vector<8x32xf32>
    %66 = arith.addf %65, %64 : vector<8x32xf32>
    %67 = arith.mulf %61, %66 : vector<8x32xf32>
    %68 = arith.addf %52, %67 : vector<8x32xf32>
    %c0_41 = arith.constant 0 : index
    %c0_42 = arith.constant 0 : index
    %69 = vector.load %arg8[%c0_41, %c0_42] : memref<32x2xf32, #tpu.memory_space<vmem>>, vector<32x2xf32>
    %cst_43 = arith.constant dense<0.000000e+00> : vector<8x2xf32>
    %70 = tpu.matmul %68, %69, %cst_43 {dimension_numbers = #tpu.dot_dimension_numbers<[1], [0], [0], [1], [0, 0, 1, 1], [], []>} : vector<8x32xf32>, vector<32x2xf32>, vector<8x2xf32> -> vector<8x2xf32>
    %c0_44 = arith.constant 0 : index
    %c0_45 = arith.constant 0 : index
    %71 = vector.load %arg9[%c0_44, %c0_45] : memref<1x2xf32, #tpu.memory_space<vmem>>, vector<1x2xf32>
    %72 = vector.broadcast %71 : vector<1x2xf32> to vector<8x2xf32>
    %73 = arith.addf %70, %72 : vector<8x2xf32>
    %c0_46 = arith.constant 0 : index
    %c0_47 = arith.constant 0 : index
    %74 = vector.load %arg10[%c0_46, %c0_47] : memref<8x2xf32, #tpu.memory_space<vmem>>, vector<8x2xf32>
    tpu.vector_store %arg10[%c0_46, %c0_47], %73 {strides = array<i32>} : memref<8x2xf32, #tpu.memory_space<vmem>>, vector<8x2xf32>,
    return
  }
  func.func @transform_0(%arg0: i32) -> (i32, i32) {
    %c0_i32 = arith.constant 0 : i32
    %c0_i32_0 = arith.constant 0 : i32
    return %arg0, %c0_i32 : i32, i32
  }
  func.func @transform_1(%arg0: i32) -> (i32, i32) {
    %c0_i32 = arith.constant 0 : i32
    %c0_i32_0 = arith.constant 0 : i32
    %c0_i32_1 = arith.constant 0 : i32
    return %c0_i32, %c0_i32_0 : i32, i32
  }
  func.func @transform_2(%arg0: i32) -> (i32, i32) {
    %c0_i32 = arith.constant 0 : i32
    %c0_i32_0 = arith.constant 0 : i32
    %c0_i32_1 = arith.constant 0 : i32
    return %c0_i32, %c0_i32_0 : i32, i32
  }
  func.func @transform_3(%arg0: i32) -> (i32, i32) {
    %c0_i32 = arith.constant 0 : i32
    %c0_i32_0 = arith.constant 0 : i32
    %c0_i32_1 = arith.constant 0 : i32
    return %c0_i32, %c0_i32_0 : i32, i32
  }
  func.func @transform_4(%arg0: i32) -> (i32, i32) {
    %c0_i32 = arith.constant 0 : i32
    %c0_i32_0 = arith.constant 0 : i32
    return %arg0, %c0_i32 : i32, i32
  }
  func.func @transform_5(%arg0: i32) -> (i32, i32, i32) {
    %c0_i32 = arith.constant 0 : i32
    %c0_i32_0 = arith.constant 0 : i32
    %c0_i32_1 = arith.constant 0 : i32
    %c0_i32_2 = arith.constant 0 : i32
    return %c0_i32, %c0_i32_0, %c0_i32_1 : i32, i32, i32
  }
  func.func @transform_6(%arg0: i32) -> (i32, i32, i32) {
    %c0_i32 = arith.constant 0 : i32
    %c0_i32_0 = arith.constant 0 : i32
    %c0_i32_1 = arith.constant 0 : i32
    %c0_i32_2 = arith.constant 0 : i32
    return %c0_i32, %c0_i32_0, %c0_i32_1 : i32, i32, i32
  }
  func.func @transform_7(%arg0: i32) -> (i32, i32) {
    %c0_i32 = arith.constant 0 : i32
    %c0_i32_0 = arith.constant 0 : i32
    %c0_i32_1 = arith.constant 0 : i32
    return %c0_i32, %c0_i32_0 : i32, i32
  }
  func.func @transform_8(%arg0: i32) -> (i32, i32) {
    %c0_i32 = arith.constant 0 : i32
    %c0_i32_0 = arith.constant 0 : i32
    %c0_i32_1 = arith.constant 0 : i32
    return %c0_i32, %c0_i32_0 : i32, i32
  }
  func.func @transform_9(%arg0: i32) -> (i32, i32) {
    %c0_i32 = arith.constant 0 : i32
    %c0_i32_0 = arith.constant 0 : i32
    return %arg0, %c0_i32 : i32, i32
  }
}

</mosaic_0001>

<llo_original>
// kernel: tpu_custom_call.1
$region0: #{tpu_custom_call.1}
  #allocation0 [shape = 'u32[]', space=smem, size = 0x4, offset = 0x4, fixed_abs, tag = 'smem constant byte address 0x4 - core index']
  #allocation1 [shape = 'u32[72,128]{1,0:T(1,128)}', space=vmem, size = 0x9000, scoped, tag = 'internal scratch']
  %s0 = inlined_call_operand.vmem [shape: f32[8,48], index: 0, kind: input, shape index: {}]
  %s1 = inlined_call_operand.vmem [shape: f32[1,48], index: 1, kind: input, shape index: {}]
  %s2 = inlined_call_operand.vmem [shape: f32[48,32], index: 2, kind: input, shape index: {}]
  %s3 = inlined_call_operand.vmem [shape: f32[48,32], index: 3, kind: input, shape index: {}]
  %s4 = inlined_call_operand.vmem [shape: f32[8,32], index: 4, kind: input, shape index: {}]
  %s5 = inlined_call_operand.vmem [shape: f32[3,32,32], index: 5, kind: input, shape index: {}]
  %s6 = inlined_call_operand.vmem [shape: f32[3,1,32], index: 6, kind: input, shape index: {}]
  %s7 = inlined_call_operand.vmem [shape: f32[32,2], index: 7, kind: input, shape index: {}]
  %s8 = inlined_call_operand.vmem [shape: f32[1,2], index: 8, kind: input, shape index: {}]
  %s9 = inlined_call_operand.vmem [shape: f32[8,2], index: 9, kind: output, shape index: {}]
  %s10 = sld [smem:[#allocation0]]
  $region46: #{tpu_custom_call.1} parent=0
    _
  %s12 = ssub.s32 1, %s10
  %s13 = scalar_select 0, %s12, %s10
  // Predicated region
  $region2: #{tpu_custom_call.1} parent=0 // pred_check
    _
  $region3: #{tpu_custom_call.1} parent=0 // pred_check_branch
    %15 = sbr.rel (0) target = $region5
  $region4: #{tpu_custom_call.1} parent=0 // pred_region
    _
  $region5: #{tpu_custom_call.1} parent=0 // pred_fallthru
    _
  // Predicated region
  $region6: #{tpu_custom_call.1} parent=0 // pred_check
    _
  $region7: #{tpu_custom_call.1} parent=0 // pred_check_branch
    %17 = sbr.rel (0) target = $region9
  $region8: #{tpu_custom_call.1} parent=0 // pred_region
    _
  $region9: #{tpu_custom_call.1} parent=0 // pred_fallthru
    _
  // Predicated region
  $region10: #{tpu_custom_call.1} parent=0 // pred_check
    _
  $region11: #{tpu_custom_call.1} parent=0 // pred_check_branch
    %19 = sbr.rel (0) target = $region13
  $region12: #{tpu_custom_call.1} parent=0 // pred_region
    _
  $region13: #{tpu_custom_call.1} parent=0 // pred_fallthru
    _
  // Predicated region
  $region14: #{tpu_custom_call.1} parent=0 // pred_check
    _
  $region15: #{tpu_custom_call.1} parent=0 // pred_check_branch
    %21 = sbr.rel (0) target = $region17
  $region16: #{tpu_custom_call.1} parent=0 // pred_region
    _
  $region17: #{tpu_custom_call.1} parent=0 // pred_fallthru
    _
  // Predicated region
  $region18: #{tpu_custom_call.1} parent=0 // pred_check
    _
  $region19: #{tpu_custom_call.1} parent=0 // pred_check_branch
    %23 = sbr.rel (0) target = $region21
  $region20: #{tpu_custom_call.1} parent=0 // pred_region
    _
  $region21: #{tpu_custom_call.1} parent=0 // pred_fallthru
    _
  // Predicated region
  $region22: #{tpu_custom_call.1} parent=0 // pred_check
    _
  $region23: #{tpu_custom_call.1} parent=0 // pred_check_branch
    %25 = sbr.rel (0) target = $region25
  $region24: #{tpu_custom_call.1} parent=0 // pred_region
    _
  $region25: #{tpu_custom_call.1} parent=0 // pred_fallthru
    _
  // Predicated region
  $region26: #{tpu_custom_call.1} parent=0 // pred_check
    _
  $region27: #{tpu_custom_call.1} parent=0 // pred_check_branch
    %27 = sbr.rel (0) target = $region29
  $region28: #{tpu_custom_call.1} parent=0 // pred_region
    _
  $region29: #{tpu_custom_call.1} parent=0 // pred_fallthru
    _
  // Predicated region
  $region30: #{tpu_custom_call.1} parent=0 // pred_check
    _
  $region31: #{tpu_custom_call.1} parent=0 // pred_check_branch
    %29 = sbr.rel (0) target = $region33
  $region32: #{tpu_custom_call.1} parent=0 // pred_region
    _
  $region33: #{tpu_custom_call.1} parent=0 // pred_fallthru
    _
  // Predicated region
  $region34: #{tpu_custom_call.1} parent=0 // pred_check
    _
  $region35: #{tpu_custom_call.1} parent=0 // pred_check_branch
    %31 = sbr.rel (0) target = $region37
  $region36: #{tpu_custom_call.1} parent=0 // pred_region
    _
  $region37: #{tpu_custom_call.1} parent=0 // pred_fallthru
    _
  %v32 = vld [vmem:[%s0] sm:$0xff]
  %v33 = vld [vmem:[%s1] sm:$0x1]
  %v35 = vperm.slane %v33, 0
  %v37 = vmul.f32 %v32, %v35
  %v38 = vand.u32 2147483647, %v37
  %vm39 = vcmp.le.f32.partialorder %v38, 0.7853982
  %vm40 = vcmp.lt.s32.totalorder %v37, 0
  %v41 = vand.u32 %v37, 2139095040
  %v42 = vshrl.u32 %v41, 23
  %v43 = vsub.s32 %v42, 127
  %v44 = vand.u32 2147483647, %v37
  %v45 = vand.u32 %v44, 8388607
  %v46 = vor.u32 %v45, 8388608
  %v47 = vsub.s32 0, %v46
  %v48 = vadd.s32 %v43, 1
  %vm49 = vcmp.gt.s32.totalorder %v48, 0
  %v50 = vsel %vm49, %v48, 0
  %v51 = vshrl.u32 %v50, 5
  %v52 = vand.u32 %v50, 31
  %v53 = vsub.s32 32, %v52
  %v54 = vshrl.u32 683565275, %v53
  %v55 = vshll.u32 683565275, %v52
  %v56 = vshrl.u32 2475754826, %v53
  %v57 = vor.u32 %v55, %v56
  %v58 = vshll.u32 2475754826, %v52
  %v59 = vshrl.u32 2131351028, %v53
  %v60 = vor.u32 %v58, %v59
  %v61 = vshll.u32 2131351028, %v52
  %v62 = vshrl.u32 2102212464, %v53
  %v63 = vor.u32 %v61, %v62
  %v64 = vshll.u32 2102212464, %v52
  %v65 = vshrl.u32 920167782, %v53
  %v66 = vor.u32 %v64, %v65
  %v67 = vshll.u32 920167782, %v52
  %v68 = vshrl.u32 1326507024, %v53
  %v69 = vor.u32 %v67, %v68
  %vm70 = vcmp.lt.s32.totalorder %v51, 1
  %vm71 = vcmp.lt.s32.totalorder %v51, 2
  %vm72 = vcmp.lt.s32.totalorder %v51, 3
  %vm73 = vcmp.lt.s32.totalorder %v51, 4
  %v74 = vsel %vm70, %v54, %v57
  %v75 = vsel %vm73, %v63, 2102212464
  %v76 = vsel %vm72, %v60, %v75
  %v77 = vsel %vm71, %v74, %v76
  %v78 = vsel %vm70, %v57, %v60
  %v79 = vsel %vm73, %v66, 920167782
  %v80 = vsel %vm72, %v63, %v79
  %v81 = vsel %vm71, %v78, %v80
  %v82 = vsel %vm70, %v60, %v63
  %v83 = vsel %vm73, %v69, 1326507024
  %v84 = vsel %vm72, %v66, %v83
  %v85 = vsel %vm71, %v82, %v84
  %v86 = vshll.u32 %v46, 8
  %v87 = vand.u32 %v86, 65535
  %v88 = vshrl.u32 %v86, 16
  %v89 = vand.u32 %v85, 65535
  %v90 = vshrl.u32 %v85, 16
  %v91 = vmul.u32 %v87, %v89
  %v92 = vmul.u32 %v87, %v90
  %v93 = vmul.u32 %v88, %v89
  %v94 = vmul.u32 %v88, %v90
  %v95 = vshll.u32 %v92, 16
  %v96 = vshrl.u32 %v92, 16
  %v97 = vshll.u32 %v93, 16
  %v98 = vshrl.u32 %v93, 16
  %vm99 = vc.u32 %v91, %v95
  %v100 = vsel %vm99, 1, 0
  %v101 = vadd.s32 %v91, %v95
  %v102 = vadd.s32 %v94, %v100
  %vm103 = vc.u32 %v101, %v97
  %v104 = vsel %vm103, 1, 0
  %v105 = vadd.s32 %v101, %v97
  %v106 = vadd.s32 %v102, %v104
  %v107 = vadd.s32 %v106, %v96
  %v108 = vadd.s32 %v107, %v98
  %v109 = vand.u32 %v86, 65535
  %v110 = vshrl.u32 %v86, 16
  %v111 = vand.u32 %v81, 65535
  %v112 = vshrl.u32 %v81, 16
  %v113 = vmul.u32 %v109, %v111
  %v114 = vmul.u32 %v109, %v112
  %v115 = vmul.u32 %v110, %v111
  %v116 = vmul.u32 %v110, %v112
  %v117 = vshll.u32 %v114, 16
  %v118 = vshrl.u32 %v114, 16
  %v119 = vshll.u32 %v115, 16
  %v120 = vshrl.u32 %v115, 16
  %vm121 = vc.u32 %v113, %v117
  %v122 = vsel %vm121, 1, 0
  %v123 = vadd.s32 %v113, %v117
  %v124 = vadd.s32 %v116, %v122
  %vm125 = vc.u32 %v123, %v119
  %v126 = vsel %vm125, 1, 0
  %v127 = vadd.s32 %v123, %v119
  %v128 = vadd.s32 %v124, %v126
  %v129 = vadd.s32 %v128, %v118
  %v130 = vadd.s32 %v129, %v120
  %v131 = vmul.u32 %v86, %v77
  %v132 = vadd.s32 %v108, %v127
  %vm133 = vc.u32 %v108, %v127
  %v134 = vadd.s32 %v130, 1
  %v135 = vsel %vm133, %v134, %v130
  %v136 = vadd.s32 %v131, %v135
  %v137 = vadd.s32 %v136, 536870912
  %v138 = vshrl.u32 %v137, 30
  %v139 = vshll.u32 %v138, 30
  %v140 = vsub.s32 %v136, %v139
  %vm141 = vcmp.lt.s32.totalorder %v140, 0
  %v142 = vsub.s32 0, %v140
  %v143 = vsel %vm141, %v142, %v140
  %v144 = vclz %v143
  %v145 = vsub.s32 %v144, 2
  %vm146 = vcmp.gt.s32.totalorder 0, %v145
  %v147 = vsel %vm146, 0, %v145
  %v148 = vsub.s32 32, %v147
  %v149 = vshll.u32 %v140, %v147
  %v150 = vshrl.u32 %v132, %v148
  %v151 = vor.u32 %v149, %v150
  %v152 = vsub.s32 4294967266, %v147
  %v153 = vadd.s32 %v152, 127
  %v154 = vshll.u32 %v153, 23
  %v155 = vor.u32 4788187, %v154
  %v156 = vand.u32 2147483647, %v155
  %v158 = vcvt.s32.f32 %v151
  %v159 = vmul.f32 %v158, %v156
  %v160 = vxor.u32 %v159, 2147483648
  %v161 = vsel %vm40, %v160, %v159
  %v162 = vsub.s32 4, %v138
  %v163 = vsel %vm40, %v162, %v138
  %v164 = vsel %vm39, %v37, %v161
  %v165 = vsel %vm39, 0, %v163
  %v166 = vmul.f32 %v164, %v164
  %v167 = vmul.f32 %v166, -0.001358992
  %v168 = vadd.f32 %v167, 0.041655596
  %v169 = vmul.f32 %v166, %v168
  %v170 = vadd.f32 %v169, -0.4999988
  %v171 = vmul.f32 %v166, %v170
  %v172 = vadd.f32 1.0, %v171
  %v173 = vmul.f32 %v164, %v164
  %v174 = vmul.f32 %v173, -0.00019511016
  %v175 = vadd.f32 %v174, 0.008332121
  %v176 = vmul.f32 %v173, %v175
  %v177 = vadd.f32 %v176, -0.16666654
  %v178 = vmul.f32 %v173, %v177
  %v179 = vadd.f32 %v178, 1.0
  %v180 = vmul.f32 %v179, %v164
  %vm181 = vweird.f32 %v37
  %v182 = vadd.s32 %v165, 3
  %v183 = vand.u32 %v182, 3
  %vm184 = vcmp.lt.s32.totalorder %v183, 2
  %vm185 = vcmp.eq.s32.totalorder %v183, 0
  %v186 = vxor.u32 %v180, 2147483648
  %v187 = vsel %vm185, %v172, %v186
  %vm188 = vcmp.eq.s32.totalorder %v183, 2
  %v189 = vxor.u32 %v172, 2147483648
  %v190 = vsel %vm188, %v189, %v180
  %v191 = vsel %vm184, %v187, %v190
  %v192 = vsel %vm181, nan, %v191
  %v193 = vld [vmem:[%s2] sm:$0xff]
  %v194 = vld [vmem:[%s2 + $0x8] sm:$0xff]
  %v195 = vld [vmem:[%s2 + $0x10] sm:$0xff]
  %v196 = vld [vmem:[%s2 + $0x18] sm:$0xff]
  %v197 = vld [vmem:[%s2 + $0x20] sm:$0xff]
  %v198 = vld [vmem:[%s2 + $0x28] sm:$0xff]
  %v199 = vand.u32 2147483647, %v37
  %vm200 = vcmp.le.f32.partialorder %v199, 0.7853982
  %vm201 = vcmp.lt.s32.totalorder %v37, 0
  %v202 = vand.u32 %v37, 2139095040
  %v203 = vshrl.u32 %v202, 23
  %v204 = vsub.s32 %v203, 127
  %v205 = vand.u32 2147483647, %v37
  %v206 = vand.u32 %v205, 8388607
  %v207 = vor.u32 %v206, 8388608
  %v208 = vsub.s32 0, %v207
  %v209 = vadd.s32 %v204, 1
  %vm210 = vcmp.gt.s32.totalorder %v209, 0
  %v211 = vsel %vm210, %v209, 0
  %v212 = vshrl.u32 %v211, 5
  %v213 = vand.u32 %v211, 31
  %v214 = vsub.s32 32, %v213
  %v215 = vshrl.u32 683565275, %v214
  %v216 = vshll.u32 683565275, %v213
  %v217 = vshrl.u32 2475754826, %v214
  %v218 = vor.u32 %v216, %v217
  %v219 = vshll.u32 2475754826, %v213
  %v220 = vshrl.u32 2131351028, %v214
  %v221 = vor.u32 %v219, %v220
  %v222 = vshll.u32 2131351028, %v213
  %v223 = vshrl.u32 2102212464, %v214
  %v224 = vor.u32 %v222, %v223
  %v225 = vshll.u32 2102212464, %v213
  %v226 = vshrl.u32 920167782, %v214
  %v227 = vor.u32 %v225, %v226
  %v228 = vshll.u32 920167782, %v213
  %v229 = vshrl.u32 1326507024, %v214
  %v230 = vor.u32 %v228, %v229
  %vm231 = vcmp.lt.s32.totalorder %v212, 1
  %vm232 = vcmp.lt.s32.totalorder %v212, 2
  %vm233 = vcmp.lt.s32.totalorder %v212, 3
  %vm234 = vcmp.lt.s32.totalorder %v212, 4
  %v235 = vsel %vm231, %v215, %v218
  %v236 = vsel %vm234, %v224, 2102212464
  %v237 = vsel %vm233, %v221, %v236
  %v238 = vsel %vm232, %v235, %v237
  %v239 = vsel %vm231, %v218, %v221
  %v240 = vsel %vm234, %v227, 920167782
  %v241 = vsel %vm233, %v224, %v240
  %v242 = vsel %vm232, %v239, %v241
  %v243 = vsel %vm231, %v221, %v224
  %v244 = vsel %vm234, %v230, 1326507024
  %v245 = vsel %vm233, %v227, %v244
  %v246 = vsel %vm232, %v243, %v245
  %v247 = vshll.u32 %v207, 8
  %v248 = vand.u32 %v247, 65535
  %v249 = vshrl.u32 %v247, 16
  %v250 = vand.u32 %v246, 65535
  %v251 = vshrl.u32 %v246, 16
  %v252 = vmul.u32 %v248, %v250
  %v253 = vmul.u32 %v248, %v251
  %v254 = vmul.u32 %v249, %v250
  %v255 = vmul.u32 %v249, %v251
  %v256 = vshll.u32 %v253, 16
  %v257 = vshrl.u32 %v253, 16
  %v258 = vshll.u32 %v254, 16
  %v259 = vshrl.u32 %v254, 16
  %vm260 = vc.u32 %v252, %v256
  %v261 = vsel %vm260, 1, 0
  %v262 = vadd.s32 %v252, %v256
  %v263 = vadd.s32 %v255, %v261
  %vm264 = vc.u32 %v262, %v258
  %v265 = vsel %vm264, 1, 0
  %v266 = vadd.s32 %v262, %v258
  %v267 = vadd.s32 %v263, %v265
  %v268 = vadd.s32 %v267, %v257
  %v269 = vadd.s32 %v268, %v259
  %v270 = vand.u32 %v247, 65535
  %v271 = vshrl.u32 %v247, 16
  %v272 = vand.u32 %v242, 65535
  %v273 = vshrl.u32 %v242, 16
  %v274 = vmul.u32 %v270, %v272
  %v275 = vmul.u32 %v270, %v273
  %v276 = vmul.u32 %v271, %v272
  %v277 = vmul.u32 %v271, %v273
  %v278 = vshll.u32 %v275, 16
  %v279 = vshrl.u32 %v275, 16
  %v280 = vshll.u32 %v276, 16
  %v281 = vshrl.u32 %v276, 16
  %vm282 = vc.u32 %v274, %v278
  %v283 = vsel %vm282, 1, 0
  %v284 = vadd.s32 %v274, %v278
  %v285 = vadd.s32 %v277, %v283
  %vm286 = vc.u32 %v284, %v280
  %v287 = vsel %vm286, 1, 0
  %v288 = vadd.s32 %v284, %v280
  %v289 = vadd.s32 %v285, %v287
  %v290 = vadd.s32 %v289, %v279
  %v291 = vadd.s32 %v290, %v281
  %v292 = vmul.u32 %v247, %v238
  %v293 = vadd.s32 %v269, %v288
  %vm294 = vc.u32 %v269, %v288
  %v295 = vadd.s32 %v291, 1
  %v296 = vsel %vm294, %v295, %v291
  %v297 = vadd.s32 %v292, %v296
  %v298 = vadd.s32 %v297, 536870912
  %v299 = vshrl.u32 %v298, 30
  %v300 = vshll.u32 %v299, 30
  %v301 = vsub.s32 %v297, %v300
  %vm302 = vcmp.lt.s32.totalorder %v301, 0
  %v303 = vsub.s32 0, %v301
  %v304 = vsel %vm302, %v303, %v301
  %v305 = vclz %v304
  %v306 = vsub.s32 %v305, 2
  %vm307 = vcmp.gt.s32.totalorder 0, %v306
  %v308 = vsel %vm307, 0, %v306
  %v309 = vsub.s32 32, %v308
  %v310 = vshll.u32 %v301, %v308
  %v311 = vshrl.u32 %v293, %v309
  %v312 = vor.u32 %v310, %v311
  %v313 = vsub.s32 4294967266, %v308
  %v314 = vadd.s32 %v313, 127
  %v315 = vshll.u32 %v314, 23
  %v316 = vor.u32 4788187, %v315
  %v317 = vand.u32 2147483647, %v316
  %v319 = vcvt.s32.f32 %v312
  %v320 = vmul.f32 %v319, %v317
  %v321 = vxor.u32 %v320, 2147483648
  %v322 = vsel %vm201, %v321, %v320
  %v323 = vsub.s32 4, %v299
  %v324 = vsel %vm201, %v323, %v299
  %v325 = vsel %vm200, %v37, %v322
  %v326 = vsel %vm200, 0, %v324
  %v327 = vmul.f32 %v325, %v325
  %v328 = vmul.f32 %v327, -0.001358992
  %v329 = vadd.f32 %v328, 0.041655596
  %v330 = vmul.f32 %v327, %v329
  %v331 = vadd.f32 %v330, -0.4999988
  %v332 = vmul.f32 %v327, %v331
  %v333 = vadd.f32 1.0, %v332
  %v334 = vmul.f32 %v325, %v325
  %v335 = vmul.f32 %v334, -0.00019511016
  %v336 = vadd.f32 %v335, 0.008332121
  %v337 = vmul.f32 %v334, %v336
  %v338 = vadd.f32 %v337, -0.16666654
  %v339 = vmul.f32 %v334, %v338
  %v340 = vadd.f32 %v339, 1.0
  %v341 = vmul.f32 %v340, %v325
  %vm342 = vweird.f32 %v37
  %v343 = vand.u32 %v326, 3
  %vm344 = vcmp.lt.s32.totalorder %v343, 2
  %vm345 = vcmp.eq.s32.totalorder %v343, 0
  %v346 = vxor.u32 %v341, 2147483648
  %v347 = vsel %vm345, %v333, %v346
  %vm348 = vcmp.eq.s32.totalorder %v343, 2
  %v349 = vxor.u32 %v333, 2147483648
  %v350 = vsel %vm348, %v349, %v341
  %v351 = vsel %vm344, %v347, %v350
  %v352 = vsel %vm342, nan, %v351
  %v353 = vld [vmem:[%s3] sm:$0xff]
  %v354 = vld [vmem:[%s3 + $0x8] sm:$0xff]
  %v355 = vld [vmem:[%s3 + $0x10] sm:$0xff]
  %v356 = vld [vmem:[%s3 + $0x18] sm:$0xff]
  %v357 = vld [vmem:[%s3 + $0x20] sm:$0xff]
  %v358 = vld [vmem:[%s3 + $0x28] sm:$0xff]
  %vm359 = vcmask 392192
  %v361 = vsel %vm359, %v352, 0
  %363 = vmatpush.msra.mxu0 0.0
  %364 = vmatpush.msra.mxu0 0.0
  %365 = vmatpush.msra.mxu0 0.0
  %366 = vmatpush.msra.mxu0 0.0
  %367 = vmatpush.msra.mxu0 0.0
  %368 = vmatpush.msra.mxu0 0.0
  %369 = vmatpush.msra.mxu0 0.0
  %370 = vmatpush.msra.mxu0 0.0
  %371 = vmatpush.msra.mxu0 0.0
  %372 = vmatpush.msra.mxu0 0.0
  %373 = vmatpush.msra.mxu0 %v358
  %374 = vmatpush.msra.mxu0 %v357
  %375 = vmatpush.msra.mxu0 %v356
  %376 = vmatpush.msra.mxu0 %v355
  %377 = vmatpush.msra.mxu0 %v354
  %378 = vmatpush.msra.mxu0 %v353
  %379 = vmatmul.f32.gmra.mxu0 %v361
  %v380 = vpop.f32.mrf.mxu0
  %v381 = vadd.f32 0.0, %v380
  %382 = vdwg.mxu0
  %v384 = vsel %vm359, %v192, 0
  %386 = vmatpush.msra.mxu0 0.0
  %387 = vmatpush.msra.mxu0 0.0
  %388 = vmatpush.msra.mxu0 0.0
  %389 = vmatpush.msra.mxu0 0.0
  %390 = vmatpush.msra.mxu0 0.0
  %391 = vmatpush.msra.mxu0 0.0
  %392 = vmatpush.msra.mxu0 0.0
  %393 = vmatpush.msra.mxu0 0.0
  %394 = vmatpush.msra.mxu0 0.0
  %395 = vmatpush.msra.mxu0 0.0
  %396 = vmatpush.msra.mxu0 %v198
  %397 = vmatpush.msra.mxu0 %v197
  %398 = vmatpush.msra.mxu0 %v196
  %399 = vmatpush.msra.mxu0 %v195
  %400 = vmatpush.msra.mxu0 %v194
  %401 = vmatpush.msra.mxu0 %v193
  %402 = vmatmul.f32.gmra.mxu0 %v384
  %v403 = vpop.f32.mrf.mxu0
  %v404 = vadd.f32 %v381, %v403
  %405 = vdwg.mxu0
  %v406 = vld [vmem:[%s4] sm:$0xff]
  %v407 = vadd.f32 %v404, %v406
  %v408 = vmul.f32 %v407, 0.5
  %v409 = vmul.f32 %v407, 0.70710677
  %v410 = vmul.f32 %v409, %v409
  %v411 = vmin.f32 16.0, %v410
  %v412 = vmul.f32 %v411, 2.1237322e-06
  %v413 = vadd.f32 %v412, 0.00028619796
  %v414 = vmul.f32 %v411, %v413
  %v415 = vadd.f32 %v414, 0.0036580483
  %v416 = vmul.f32 %v411, %v415
  %v417 = vadd.f32 %v416, 0.05243302
  %v418 = vmul.f32 %v411, %v417
  %v419 = vadd.f32 %v418, 0.18741608
  %v420 = vmul.f32 %v411, %v419
  %v421 = vadd.f32 %v420, 1.1283791
  %v422 = vmul.f32 %v409, %v421
  %v423 = vmul.f32 %v411, 3.8918573e-05
  %v424 = vadd.f32 %v423, 0.001143296
  %v425 = vmul.f32 %v411, %v424
  %v426 = vadd.f32 %v425, 0.014752088
  %v427 = vmul.f32 %v411, %v426
  %v428 = vadd.f32 %v427, 0.112945676
  %v429 = vmul.f32 %v411, %v428
  %v430 = vadd.f32 %v429, 0.4994258
  %v431 = vmul.f32 %v411, %v430
  %v432 = vadd.f32 %v431, 1.0
  %v433 = vrcp.pop %v432
  %v434 = vmul.f32 %v432, %v433
  %v435 = vsub.f32 1.0, %v434
  %v436 = vmul.f32 %v433, %v435
  %v437 = vadd.f32 %v433, %v436
  %vm438 = vweird.f32 %v432
  %vm439 = vweird.f32 %v433
  %vm440 = vmor %vm438, %vm439
  %v441 = vsel %vm440, %v433, %v437
  %v442 = vand.u32 2147483647, %v432
  %vm443 = vcmp.eq.f32.partialorder %v442, 8.507059e+37
  %v444 = vand.u32 %v432, 2147483648
  %v445 = vor.u32 1.1754944e-38, %v444
  %v446 = vsel %vm443, %v445, %v441
  %v447 = vmul.f32 %v422, %v446
  %v448 = vmin.f32 %v447, 1.0
  %v449 = vmax.f32 %v448, -1.0
  %v450 = vadd.f32 %v449, 1.0
  %v451 = vmul.f32 %v408, %v450
  %v452 = vld [vmem:[%s5] sm:$0xff]
  %v453 = vld [vmem:[%s5 + $0x8] sm:$0xff]
  %v454 = vld [vmem:[%s5 + $0x10] sm:$0xff]
  %v455 = vld [vmem:[%s5 + $0x18] sm:$0xff]
  %v456 = vld [vmem:[%s6] sm:$0x1]
  %v458 = vperm.slane %v456, 0
  %vm460 = vcmask 261120
  %v462 = vsel %vm460, %v451, 0
  %464 = vmatpush.msra.mxu0 0.0
  %465 = vmatpush.msra.mxu0 0.0
  %466 = vmatpush.msra.mxu0 0.0
  %467 = vmatpush.msra.mxu0 0.0
  %468 = vmatpush.msra.mxu0 0.0
  %469 = vmatpush.msra.mxu0 0.0
  %470 = vmatpush.msra.mxu0 0.0
  %471 = vmatpush.msra.mxu0 0.0
  %472 = vmatpush.msra.mxu0 0.0
  %473 = vmatpush.msra.mxu0 0.0
  %474 = vmatpush.msra.mxu0 0.0
  %475 = vmatpush.msra.mxu0 0.0
  %476 = vmatpush.msra.mxu0 %v455
  %477 = vmatpush.msra.mxu0 %v454
  %478 = vmatpush.msra.mxu0 %v453
  %479 = vmatpush.msra.mxu0 %v452
  %480 = vmatmul.f32.gmra.mxu0 %v462
  %v481 = vpop.f32.mrf.mxu0
  %v482 = vadd.f32 %v458, %v481
  %483 = vdwg.mxu0
  %v484 = vmul.f32 %v482, 0.5
  %v485 = vmul.f32 %v482, 0.70710677
  %v486 = vmul.f32 %v485, %v485
  %v487 = vmin.f32 16.0, %v486
  %v488 = vmul.f32 %v487, 2.1237322e-06
  %v489 = vadd.f32 %v488, 0.00028619796
  %v490 = vmul.f32 %v487, %v489
  %v491 = vadd.f32 %v490, 0.0036580483
  %v492 = vmul.f32 %v487, %v491
  %v493 = vadd.f32 %v492, 0.05243302
  %v494 = vmul.f32 %v487, %v493
  %v495 = vadd.f32 %v494, 0.18741608
  %v496 = vmul.f32 %v487, %v495
  %v497 = vadd.f32 %v496, 1.1283791
  %v498 = vmul.f32 %v485, %v497
  %v499 = vmul.f32 %v487, 3.8918573e-05
  %v500 = vadd.f32 %v499, 0.001143296
  %v501 = vmul.f32 %v487, %v500
  %v502 = vadd.f32 %v501, 0.014752088
  %v503 = vmul.f32 %v487, %v502
  %v504 = vadd.f32 %v503, 0.112945676
  %v505 = vmul.f32 %v487, %v504
  %v506 = vadd.f32 %v505, 0.4994258
  %v507 = vmul.f32 %v487, %v506
  %v508 = vadd.f32 %v507, 1.0
  %v509 = vrcp.pop %v508
  %v510 = vmul.f32 %v508, %v509
  %v511 = vsub.f32 1.0, %v510
  %v512 = vmul.f32 %v509, %v511
  %v513 = vadd.f32 %v509, %v512
  %vm514 = vweird.f32 %v508
  %vm515 = vweird.f32 %v509
  %vm516 = vmor %vm514, %vm515
  %v517 = vsel %vm516, %v509, %v513
  %v518 = vand.u32 2147483647, %v508
  %vm519 = vcmp.eq.f32.partialorder %v518, 8.507059e+37
  %v520 = vand.u32 %v508, 2147483648
  %v521 = vor.u32 1.1754944e-38, %v520
  %v522 = vsel %vm519, %v521, %v517
  %v523 = vmul.f32 %v498, %v522
  %v524 = vmin.f32 %v523, 1.0
  %v525 = vmax.f32 %v524, -1.0
  %v526 = vadd.f32 %v525, 1.0
  %v527 = vmul.f32 %v484, %v526
  %v528 = vadd.f32 %v451, %v527
  %s529 = scalar_lea.vmem %s5, 32
  %v530 = vld [vmem:[%s529] sm:$0xff]
  %v531 = vld [vmem:[%s529 + $0x8] sm:$0xff]
  %v532 = vld [vmem:[%s529 + $0x10] sm:$0xff]
  %v533 = vld [vmem:[%s529 + $0x18] sm:$0xff]
  %s534 = scalar_lea.vmem %s6, 1
  %v535 = vld [vmem:[%s534] sm:$0x1]
  %v537 = vperm.slane %v535, 0
  %v540 = vsel %vm460, %v528, 0
  %542 = vmatpush.msra.mxu0 0.0
  %543 = vmatpush.msra.mxu0 0.0
  %544 = vmatpush.msra.mxu0 0.0
  %545 = vmatpush.msra.mxu0 0.0
  %546 = vmatpush.msra.mxu0 0.0
  %547 = vmatpush.msra.mxu0 0.0
  %548 = vmatpush.msra.mxu0 0.0
  %549 = vmatpush.msra.mxu0 0.0
  %550 = vmatpush.msra.mxu0 0.0
  %551 = vmatpush.msra.mxu0 0.0
  %552 = vmatpush.msra.mxu0 0.0
  %553 = vmatpush.msra.mxu0 0.0
  %554 = vmatpush.msra.mxu0 %v533
  %555 = vmatpush.msra.mxu0 %v532
  %556 = vmatpush.msra.mxu0 %v531
  %557 = vmatpush.msra.mxu0 %v530
  %558 = vmatmul.f32.gmra.mxu0 %v540
  %v559 = vpop.f32.mrf.mxu0
  %v560 = vadd.f32 %v537, %v559
  %561 = vdwg.mxu0
  %v562 = vmul.f32 %v560, 0.5
  %v563 = vmul.f32 %v560, 0.70710677
  %v564 = vmul.f32 %v563, %v563
  %v565 = vmin.f32 16.0, %v564
  %v566 = vmul.f32 %v565, 2.1237322e-06
  %v567 = vadd.f32 %v566, 0.00028619796
  %v568 = vmul.f32 %v565, %v567
  %v569 = vadd.f32 %v568, 0.0036580483
  %v570 = vmul.f32 %v565, %v569
  %v571 = vadd.f32 %v570, 0.05243302
  %v572 = vmul.f32 %v565, %v571
  %v573 = vadd.f32 %v572, 0.18741608
  %v574 = vmul.f32 %v565, %v573
  %v575 = vadd.f32 %v574, 1.1283791
  %v576 = vmul.f32 %v563, %v575
  %v577 = vmul.f32 %v565, 3.8918573e-05
  %v578 = vadd.f32 %v577, 0.001143296
  %v579 = vmul.f32 %v565, %v578
  %v580 = vadd.f32 %v579, 0.014752088
  %v581 = vmul.f32 %v565, %v580
  %v582 = vadd.f32 %v581, 0.112945676
  %v583 = vmul.f32 %v565, %v582
  %v584 = vadd.f32 %v583, 0.4994258
  %v585 = vmul.f32 %v565, %v584
  %v586 = vadd.f32 %v585, 1.0
  %v587 = vrcp.pop %v586
  %v588 = vmul.f32 %v586, %v587
  %v589 = vsub.f32 1.0, %v588
  %v590 = vmul.f32 %v587, %v589
  %v591 = vadd.f32 %v587, %v590
  %vm592 = vweird.f32 %v586
  %vm593 = vweird.f32 %v587
  %vm594 = vmor %vm592, %vm593
  %v595 = vsel %vm594, %v587, %v591
  %v596 = vand.u32 2147483647, %v586
  %vm597 = vcmp.eq.f32.partialorder %v596, 8.507059e+37
  %v598 = vand.u32 %v586, 2147483648
  %v599 = vor.u32 1.1754944e-38, %v598
  %v600 = vsel %vm597, %v599, %v595
  %v601 = vmul.f32 %v576, %v600
  %v602 = vmin.f32 %v601, 1.0
  %v603 = vmax.f32 %v602, -1.0
  %v604 = vadd.f32 %v603, 1.0
  %v605 = vmul.f32 %v562, %v604
  %v606 = vadd.f32 %v528, %v605
  %s607 = scalar_lea.vmem %s5, 64
  %v608 = vld [vmem:[%s607] sm:$0xff]
  %v609 = vld [vmem:[%s607 + $0x8] sm:$0xff]
  %v610 = vld [vmem:[%s607 + $0x10] sm:$0xff]
  %v611 = vld [vmem:[%s607 + $0x18] sm:$0xff]
  %s612 = scalar_lea.vmem %s6, 2
  %v613 = vld [vmem:[%s612] sm:$0x1]
  %v615 = vperm.slane %v613, 0
  %v618 = vsel %vm460, %v606, 0
  %620 = vmatpush.msra.mxu0 0.0
  %621 = vmatpush.msra.mxu0 0.0
  %622 = vmatpush.msra.mxu0 0.0
  %623 = vmatpush.msra.mxu0 0.0
  %624 = vmatpush.msra.mxu0 0.0
  %625 = vmatpush.msra.mxu0 0.0
  %626 = vmatpush.msra.mxu0 0.0
  %627 = vmatpush.msra.mxu0 0.0
  %628 = vmatpush.msra.mxu0 0.0
  %629 = vmatpush.msra.mxu0 0.0
  %630 = vmatpush.msra.mxu0 0.0
  %631 = vmatpush.msra.mxu0 0.0
  %632 = vmatpush.msra.mxu0 %v611
  %633 = vmatpush.msra.mxu0 %v610
  %634 = vmatpush.msra.mxu0 %v609
  %635 = vmatpush.msra.mxu0 %v608
  %636 = vmatmul.f32.gmra.mxu0 %v618
  %v637 = vpop.f32.mrf.mxu0
  %v638 = vadd.f32 %v615, %v637
  %639 = vdwg.mxu0
  %v640 = vmul.f32 %v638, 0.5
  %v641 = vmul.f32 %v638, 0.70710677
  %v642 = vmul.f32 %v641, %v641
  %v643 = vmin.f32 16.0, %v642
  %v644 = vmul.f32 %v643, 2.1237322e-06
  %v645 = vadd.f32 %v644, 0.00028619796
  %v646 = vmul.f32 %v643, %v645
  %v647 = vadd.f32 %v646, 0.0036580483
  %v648 = vmul.f32 %v643, %v647
  %v649 = vadd.f32 %v648, 0.05243302
  %v650 = vmul.f32 %v643, %v649
  %v651 = vadd.f32 %v650, 0.18741608
  %v652 = vmul.f32 %v643, %v651
  %v653 = vadd.f32 %v652, 1.1283791
  %v654 = vmul.f32 %v641, %v653
  %v655 = vmul.f32 %v643, 3.8918573e-05
  %v656 = vadd.f32 %v655, 0.001143296
  %v657 = vmul.f32 %v643, %v656
  %v658 = vadd.f32 %v657, 0.014752088
  %v659 = vmul.f32 %v643, %v658
  %v660 = vadd.f32 %v659, 0.112945676
  %v661 = vmul.f32 %v643, %v660
  %v662 = vadd.f32 %v661, 0.4994258
  %v663 = vmul.f32 %v643, %v662
  %v664 = vadd.f32 %v663, 1.0
  %v665 = vrcp.pop %v664
  %v666 = vmul.f32 %v664, %v665
  %v667 = vsub.f32 1.0, %v666
  %v668 = vmul.f32 %v665, %v667
  %v669 = vadd.f32 %v665, %v668
  %vm670 = vweird.f32 %v664
  %vm671 = vweird.f32 %v665
  %vm672 = vmor %vm670, %vm671
  %v673 = vsel %vm672, %v665, %v669
  %v674 = vand.u32 2147483647, %v664
  %vm675 = vcmp.eq.f32.partialorder %v674, 8.507059e+37
  %v676 = vand.u32 %v664, 2147483648
  %v677 = vor.u32 1.1754944e-38, %v676
  %v678 = vsel %vm675, %v677, %v673
  %v679 = vmul.f32 %v654, %v678
  %v680 = vmin.f32 %v679, 1.0
  %v681 = vmax.f32 %v680, -1.0
  %v682 = vadd.f32 %v681, 1.0
  %v683 = vmul.f32 %v640, %v682
  %v684 = vadd.f32 %v606, %v683
  %v685 = vld [vmem:[%s7] sm:$0xff]
  %v686 = vld [vmem:[%s7 + $0x8] sm:$0xff]
  %v687 = vld [vmem:[%s7 + $0x10] sm:$0xff]
  %v688 = vld [vmem:[%s7 + $0x18] sm:$0xff]
  %v689 = vld [vmem:[%s8] sm:$0x1]
  %v691 = vperm.slane %v689, 0
  %v694 = vsel %vm460, %v684, 0
  %696 = vmatpush.msra.mxu0 0.0
  %697 = vmatpush.msra.mxu0 0.0
  %698 = vmatpush.msra.mxu0 0.0
  %699 = vmatpush.msra.mxu0 0.0
  %700 = vmatpush.msra.mxu0 0.0
  %701 = vmatpush.msra.mxu0 0.0
  %702 = vmatpush.msra.mxu0 0.0
  %703 = vmatpush.msra.mxu0 0.0
  %704 = vmatpush.msra.mxu0 0.0
  %705 = vmatpush.msra.mxu0 0.0
  %706 = vmatpush.msra.mxu0 0.0
  %707 = vmatpush.msra.mxu0 0.0
  %708 = vmatpush.msra.mxu0 %v688
  %709 = vmatpush.msra.mxu0 %v687
  %710 = vmatpush.msra.mxu0 %v686
  %711 = vmatpush.msra.mxu0 %v685
  %712 = vmatmul.f32.gmra.mxu0 %v694
  %v713 = vpop.f32.mrf.mxu0
  %v714 = vadd.f32 %v691, %v713
  %715 = vdwg.mxu0
  %vm716 = vcmask 15360
  %717 = vst.msk [vmem:[%s9] sm:$0xff] %vm716, %v714
  // Predicated region
  $region38: #{tpu_custom_call.1} parent=0 // pred_check
    _
  $region39: #{tpu_custom_call.1} parent=0 // pred_check_branch
    %719 = sbr.rel (0) target = $region41
  $region40: #{tpu_custom_call.1} parent=0 // pred_region
    _
  $region41: #{tpu_custom_call.1} parent=0 // pred_fallthru
    _
  // Predicated region
  $region42: #{tpu_custom_call.1} parent=0 // pred_check
    _
  $region43: #{tpu_custom_call.1} parent=0 // pred_check_branch
    %721 = sbr.rel (0) target = $region45
  $region44: #{tpu_custom_call.1} parent=0 // pred_region
    _
  $region45: #{tpu_custom_call.1} parent=0 // pred_fallthru
    _

</llo_original>
